<compile_context>
chip_gen: v7x
topology: tpu7x:2x2x1
jax: 0.10.0
libtpu: 0.0.40
codegen_flags: <defaults>
</compile_context>

<pallas_src>
import jax
import jax.numpy as jnp
from jax.experimental import pallas as pl
from jax.experimental.pallas import tpu as pltpu

LANE = 128          # vreg lane width -> lane-dense padded output column count
_SINGLE_BUFFER_OK = [True]   # flipped to False if Buffered(1) is rejected


def _round_up(x, m):
    return ((x + m - 1) // m) * m


def _device_kind():
    try:
        return jax.devices()[0].device_kind.lower()
    except Exception:
        return ""


def _hidden_align(H):
    # v6e/v7x have a 2x256^2 MXU -> align big hidden dims to 256; v5e is 4x128^2
    # so 128 alignment is already optimal there (and for small H everywhere).
    if H <= 128:
        return 128
    return 128 if "v5" in _device_kind() else 256


def _default_tile_b(B):
    granule = 16                     # works for both f32 and bf16 tile layouts
    b = _round_up(B, granule)
    cap = 1024 if "v5" in _device_kind() else 512
    tile = min(b, cap)
    # v7x has 2 TensorCores: prefer >=2 "parallel" grid steps when that does not
    # shrink tiles below one granule. Single-TC parts (v5e/v6e) keep grid=(1,)
    # for small B (splitting a tiny batch only doubles per-step overhead).
    if "v7" in _device_kind() and b > granule and b <= tile:
        tile = _round_up(pl.cdiv(b, 2), granule)
    return tile


def _pad2d(a, rows, cols, dtype):
    a = jnp.asarray(a, dtype=dtype)
    pr, pc = rows - a.shape[0], cols - a.shape[1]
    if pr == 0 and pc == 0:
        return a
    return jnp.pad(a, ((0, pr), (0, pc)))


# ---------------------------------------------------------------------------
# Kernel
# ---------------------------------------------------------------------------
def multimodal_kernel(x1_ref, x2_ref, m1_ref, m2_ref, c_ref, wo_ref, bo_ref,
                      out_ref):
    f32 = jnp.float32
    cdt = m1_ref.dtype
    # In-kernel cast (VPU) right before the MXU dots; inputs stream as f32.
    x1 = x1_ref[...].astype(cdt)
    x2 = x2_ref[...].astype(cdt)

    # Folded hidden layer: z = relu(x1 @ M1 + x2 @ M2 + c)   (f32 accumulation)
    z = (jnp.dot(x1, m1_ref[...], preferred_element_type=f32)
         + jnp.dot(x2, m2_ref[...], preferred_element_type=f32)
         + c_ref[...])
    z = jnp.maximum(z, 0.0)

    # Output layer pre-activation; wo is a lane-dense [Hp, 128] slab (only
    # column 0 real) -> unmasked full-width vst. Sigmoid happens in the wrapper
    # on the real column only.
    o = jnp.dot(z.astype(wo_ref.dtype), wo_ref[...],
                preferred_element_type=f32) + bo_ref[...]
    out_ref[...] = o.astype(out_ref.dtype)


# ---------------------------------------------------------------------------
# One-time weight preparation (fold + pad + cast), reused across calls.
# ---------------------------------------------------------------------------
def prepare_params(params, *, use_bf16=True):
    """Fold layer-1 into the hidden layer (in f32), pad, and cast once."""
    f32 = jnp.float32
    w1 = jnp.asarray(params["w1"], f32)
    w2 = jnp.asarray(params["w2"], f32)
    wh = jnp.asarray(params["wh"], f32)
    wo = jnp.asarray(params["wo"], f32)
    b1 = jnp.asarray(params["b1"], f32)
    b2 = jnp.asarray(params["b2"], f32)
    bh = jnp.asarray(params["bh"], f32)
    bo = jnp.asarray(params["bo"], f32)

    D1, H = w1.shape
    D2 = w2.shape[0]
    assert wh.shape[0] == 2 * H
    wh1, wh2 = wh[:H, :], wh[H:, :]

    # Exact fold (done in f32 before any bf16 cast).
    m1 = w1 @ wh1                     # [D1, H]
    m2 = w2 @ wh2                     # [D2, H]
    c = b1 @ wh1 + b2 @ wh2 + bh      # [1, H]

    cdt = jnp.bfloat16 if use_bf16 else f32
    Hp = _round_up(H, _hidden_align(H))
    OUTp = LANE

    prep = {
        "m1": _pad2d(m1, D1, Hp, cdt),          # [D1, Hp]
        "m2": _pad2d(m2, D2, Hp, cdt),          # [D2, Hp]
        "c":  _pad2d(c, 1, Hp, f32),            # [1, Hp]
        "wo": _pad2d(wo, Hp, OUTp, cdt),        # [Hp, 128], only col 0 real
        "bo": _pad2d(bo, 1, OUTp, f32),         # [1, 128]
        "out_dtype": jnp.bfloat16 if use_bf16 else f32,
    }
    return prep


def _resident_spec(shape, single_buffer):
    idx = lambda i: (0, 0)
    if single_buffer:
        # Constant-index weights never re-DMA -> a single VMEM buffer suffices.
        return pl.BlockSpec(shape, idx, pipeline_mode=pl.Buffered(1))
    return pl.BlockSpec(shape, idx)


# ---------------------------------------------------------------------------
# Forward wrapper
# ---------------------------------------------------------------------------
def multimodal_forward(x1, x2, prep, *, tile_b=None):
    B, D1 = x1.shape
    B2, D2 = x2.shape
    assert B == B2
    assert prep["m1"].shape[0] == D1 and prep["m2"].shape[0] == D2
    Hp = prep["m1"].shape[1]
    OUTp = prep["wo"].shape[1]
    out_dtype = prep["out_dtype"]
    f32 = jnp.float32

    if tile_b is None:
        tile_b = _default_tile_b(B)
    tile_b = max(16, _round_up(int(tile_b), 16))
    Bp = _round_up(B, tile_b)
    grid = (Bp // tile_b,)

    # Activations stream in their natural f32 / natural feature width; only the
    # batch dim is (rarely) padded so the tile divides it.
    x1p = x1 if Bp == B else jnp.pad(x1, ((0, Bp - B), (0, 0)))
    x2p = x2 if Bp == B else jnp.pad(x2, ((0, Bp - B), (0, 0)))

    weight_args = (prep["m1"], prep["m2"], prep["c"], prep["wo"], prep["bo"])
    w_itemsize = jnp.dtype(prep["m1"].dtype).itemsize
    out_itemsize = jnp.dtype(out_dtype).itemsize

    flops = 2 * Bp * Hp * (D1 + D2 + OUTp)
    bytes_accessed = (Bp * (D1 + D2) * 4                      # streamed f32 x
                      + (D1 + D2 + OUTp) * Hp * w_itemsize    # weights (once)
                      + (Hp + OUTp) * 4                       # f32 biases
                      + Bp * OUTp * out_itemsize)             # output slab
    cost = pl.CostEstimate(flops=int(flops), transcendentals=0,
                           bytes_accessed=int(bytes_accessed))

    def run(single_buffer_weights):
        wbufs = 1 if single_buffer_weights else 2
        vmem_need = (
            2 * tile_b * (D1 + D2) * 4                                   # x (2 bufs)
            + wbufs * ((D1 + D2 + OUTp) * Hp * w_itemsize + (Hp + OUTp) * 4)
            + 2 * tile_b * OUTp * out_itemsize                           # out (2 bufs)
            + 4 * tile_b * Hp * 4)                                       # f32 temps
        vmem_limit = int(min(48 * 1024 * 1024,
                             max(16 * 1024 * 1024, 2 * vmem_need)))

        in_specs = [
            pl.BlockSpec((tile_b, D1), lambda i: (i, 0)),   # x1 (full last dim)
            pl.BlockSpec((tile_b, D2), lambda i: (i, 0)),   # x2 (full last dim)
        ] + [_resident_spec(w.shape, single_buffer_weights) for w in weight_args]

        return pl.pallas_call(
            multimodal_kernel,
            out_shape=jax.ShapeDtypeStruct((Bp, OUTp), out_dtype),
            grid_spec=pltpu.PrefetchScalarGridSpec(
                num_scalar_prefetch=0,
                grid=grid,
                in_specs=in_specs,
                out_specs=pl.BlockSpec((tile_b, OUTp), lambda i: (i, 0)),
            ),
            compiler_params=pltpu.CompilerParams(
                dimension_semantics=("parallel",),
                vmem_limit_bytes=vmem_limit,
            ),
            cost_estimate=cost,
        )(x1p, x2p, *weight_args)

    if _SINGLE_BUFFER_OK[0]:
        try:
            out = run(True)
        except Exception:
            # pipeline_mode=pl.Buffered(1) unsupported here -> default buffering.
            _SINGLE_BUFFER_OK[0] = False
            out = run(False)
    else:
        out = run(False)

    # Lane-dense [Bp, 128] pre-activation slab -> real [B, 1] + scalar sigmoid.
    return jax.nn.sigmoid(out[:B, :1].astype(f32))


# ---------------------------------------------------------------------------
# Reference + synthetic params
# ---------------------------------------------------------------------------
def init_params(key, input_dim1, input_dim2, hidden_dim):
    """Deterministic synthetic weights (nn.Linear init, pre-transposed to [in, out])."""
    ks = jax.random.split(key, 8)

    def lin(kw, kb, fan_in, fan_out):
        bound = 1.0 / jnp.sqrt(fan_in)
        w = jax.random.uniform(kw, (fan_in, fan_out), jnp.float32, -bound, bound)
        b = jax.random.uniform(kb, (1, fan_out), jnp.float32, -bound, bound)
        return w, b

    w1, b1 = lin(ks[0], ks[1], input_dim1, hidden_dim)
    w2, b2 = lin(ks[2], ks[3], input_dim2, hidden_dim)
    wh, bh = lin(ks[4], ks[5], hidden_dim * 2, hidden_dim)
    wo, bo = lin(ks[6], ks[7], hidden_dim, 1)
    return {"w1": w1, "b1": b1, "w2": w2, "b2": b2,
            "wh": wh, "bh": bh, "wo": wo, "bo": bo}


def reference_forward(x1, x2, p):
    h1 = x1 @ p["w1"] + p["b1"]
    h2 = x2 @ p["w2"] + p["b2"]
    h = jnp.concatenate([h1, h2], axis=-1)
    z = jax.nn.relu(h @ p["wh"] + p["bh"])
    return jax.nn.sigmoid(z @ p["wo"] + p["bo"])


if __name__ == "__main__":
    # TODO(synk): register_hooks / self.activations is PyTorch introspection of
    # intermediate tensors, not part of the forward math -> no kernel equivalent.
    key = jax.random.PRNGKey(0)
    k_x1, k_x2, k_p = jax.random.split(key, 3)

    B, D1, D2, H = 16, 16, 8, 32
    x1 = jax.random.normal(k_x1, (B, D1), jnp.float32)
    x2 = jax.random.normal(k_x2, (B, D2), jnp.float32)
    params = init_params(k_p, D1, D2, H)

    ref = reference_forward(x1, x2, params)

    # f32 path: checks the affine fold + padding rewrite (reduction order changes
    # slightly, hence atol 1e-4 instead of exact).
    prep_f32 = prepare_params(params, use_bf16=False)
    out_f32 = jax.block_until_ready(multimodal_forward(x1, x2, prep_f32))
    assert out_f32.shape == (B, 1)
    assert jnp.allclose(out_f32, ref, atol=1e-4, rtol=1e-4), "f32 mismatch vs reference"

    # Default bf16-MXU path (f32 accumulation, bf16 output slab, wrapper sigmoid).
    prep = prepare_params(params, use_bf16=True)
    out = jax.block_until_ready(multimodal_forward(x1, x2, prep))
    assert out.shape == (B, 1)
    assert jnp.allclose(out, ref, atol=2e-2, rtol=2e-2), "bf16 mismatch vs reference"

    print("KERNEL_OK")
</pallas_src>

<mosaic_0001>
module attributes {stable_mosaic.version = 11 : i64} {
  func.func @multimodal_kernel(%arg0: i32, %arg1: memref<16x16xf32, #tpu.memory_space<vmem>>, %arg2: memref<16x8xf32, #tpu.memory_space<vmem>>, %arg3: memref<16x128xf32, #tpu.memory_space<vmem>>, %arg4: memref<8x128xf32, #tpu.memory_space<vmem>>, %arg5: memref<1x128xf32, #tpu.memory_space<vmem>>, %arg6: memref<128x128xf32, #tpu.memory_space<vmem>>, %arg7: memref<1x128xf32, #tpu.memory_space<vmem>>, %arg8: memref<16x128xf32, #tpu.memory_space<vmem>>) attributes {dimension_semantics = [#tpu.dimension_semantics<parallel>], iteration_bounds = array<i64: 1>, scalar_prefetch = 0 : i64, scratch_operands = 0 : i64, tpu.core_type = #tpu.core_type<tc>, window_params = [{transform_indices = @transform_0, window_bounds = array<i64: 16, 16>}, {transform_indices = @transform_1, window_bounds = array<i64: 16, 8>}, {pipeline_mode = #tpu.pipeline_mode<synchronous>, transform_indices = @transform_2, window_bounds = array<i64: 16, 128>}, {pipeline_mode = #tpu.pipeline_mode<synchronous>, transform_indices = @transform_3, window_bounds = array<i64: 8, 128>}, {pipeline_mode = #tpu.pipeline_mode<synchronous>, transform_indices = @transform_4, window_bounds = array<i64: 1, 128>}, {pipeline_mode = #tpu.pipeline_mode<synchronous>, transform_indices = @transform_5, window_bounds = array<i64: 128, 128>}, {pipeline_mode = #tpu.pipeline_mode<synchronous>, transform_indices = @transform_6, window_bounds = array<i64: 1, 128>}, {transform_indices = @transform_7, window_bounds = array<i64: 16, 128>}]} {
    %c0 = arith.constant 0 : index
    %c0_0 = arith.constant 0 : index
    %0 = vector.load %arg1[%c0, %c0_0] : memref<16x16xf32, #tpu.memory_space<vmem>>, vector<16x16xf32>
    %c0_1 = arith.constant 0 : index
    %c0_2 = arith.constant 0 : index
    %1 = vector.load %arg2[%c0_1, %c0_2] : memref<16x8xf32, #tpu.memory_space<vmem>>, vector<16x8xf32>
    %c0_3 = arith.constant 0 : index
    %c0_4 = arith.constant 0 : index
    %2 = vector.load %arg3[%c0_3, %c0_4] : memref<16x128xf32, #tpu.memory_space<vmem>>, vector<16x128xf32>
    %cst = arith.constant dense<0.000000e+00> : vector<16x128xf32>
    %3 = tpu.matmul %0, %2, %cst {dimension_numbers = #tpu.dot_dimension_numbers<[1], [0], [0], [1], [0, 0, 1, 1], [], []>} : vector<16x16xf32>, vector<16x128xf32>, vector<16x128xf32> -> vector<16x128xf32>
    %c0_5 = arith.constant 0 : index
    %c0_6 = arith.constant 0 : index
    %4 = vector.load %arg4[%c0_5, %c0_6] : memref<8x128xf32, #tpu.memory_space<vmem>>, vector<8x128xf32>
    %cst_7 = arith.constant dense<0.000000e+00> : vector<16x128xf32>
    %5 = tpu.matmul %1, %4, %cst_7 {dimension_numbers = #tpu.dot_dimension_numbers<[1], [0], [0], [1], [0, 0, 1, 1], [], []>} : vector<16x8xf32>, vector<8x128xf32>, vector<16x128xf32> -> vector<16x128xf32>
    %6 = arith.addf %3, %5 : vector<16x128xf32>
    %c0_8 = arith.constant 0 : index
    %c0_9 = arith.constant 0 : index
    %7 = vector.load %arg5[%c0_8, %c0_9] : memref<1x128xf32, #tpu.memory_space<vmem>>, vector<1x128xf32>
    %8 = vector.broadcast %7 : vector<1x128xf32> to vector<16x128xf32>
    %9 = arith.addf %6, %8 : vector<16x128xf32>
    %cst_10 = arith.constant 0.000000e+00 : f32
    %10 = vector.broadcast %cst_10 : f32 to vector<16x128xf32>
    %11 = arith.maximumf %9, %10 : vector<16x128xf32>
    %c0_11 = arith.constant 0 : index
    %c0_12 = arith.constant 0 : index
    %12 = vector.load %arg6[%c0_11, %c0_12] : memref<128x128xf32, #tpu.memory_space<vmem>>, vector<128x128xf32>
    %cst_13 = arith.constant dense<0.000000e+00> : vector<16x128xf32>
    %13 = tpu.matmul %11, %12, %cst_13 {dimension_numbers = #tpu.dot_dimension_numbers<[1], [0], [0], [1], [0, 0, 1, 1], [], []>} : vector<16x128xf32>, vector<128x128xf32>, vector<16x128xf32> -> vector<16x128xf32>
    %c0_14 = arith.constant 0 : index
    %c0_15 = arith.constant 0 : index
    %14 = vector.load %arg7[%c0_14, %c0_15] : memref<1x128xf32, #tpu.memory_space<vmem>>, vector<1x128xf32>
    %15 = vector.broadcast %14 : vector<1x128xf32> to vector<16x128xf32>
    %16 = arith.addf %13, %15 : vector<16x128xf32>
    %c0_16 = arith.constant 0 : index
    %c0_17 = arith.constant 0 : index
    %17 = vector.load %arg8[%c0_16, %c0_17] : memref<16x128xf32, #tpu.memory_space<vmem>>, vector<16x128xf32>
    tpu.vector_store %arg8[%c0_16, %c0_17], %16 {strides = array<i32>} : memref<16x128xf32, #tpu.memory_space<vmem>>, vector<16x128xf32>,
    return
  }
  func.func @transform_0(%arg0: i32) -> (i32, i32) {
    %c0_i32 = arith.constant 0 : i32
    %c0_i32_0 = arith.constant 0 : i32
    return %arg0, %c0_i32 : i32, i32
  }
  func.func @transform_1(%arg0: i32) -> (i32, i32) {
    %c0_i32 = arith.constant 0 : i32
    %c0_i32_0 = arith.constant 0 : i32
    return %arg0, %c0_i32 : i32, i32
  }
  func.func @transform_2(%arg0: i32) -> (i32, i32) {
    %c0_i32 = arith.constant 0 : i32
    %c0_i32_0 = arith.constant 0 : i32
    %c0_i32_1 = arith.constant 0 : i32
    return %c0_i32, %c0_i32_0 : i32, i32
  }
  func.func @transform_3(%arg0: i32) -> (i32, i32) {
    %c0_i32 = arith.constant 0 : i32
    %c0_i32_0 = arith.constant 0 : i32
    %c0_i32_1 = arith.constant 0 : i32
    return %c0_i32, %c0_i32_0 : i32, i32
  }
  func.func @transform_4(%arg0: i32) -> (i32, i32) {
    %c0_i32 = arith.constant 0 : i32
    %c0_i32_0 = arith.constant 0 : i32
    %c0_i32_1 = arith.constant 0 : i32
    return %c0_i32, %c0_i32_0 : i32, i32
  }
  func.func @transform_5(%arg0: i32) -> (i32, i32) {
    %c0_i32 = arith.constant 0 : i32
    %c0_i32_0 = arith.constant 0 : i32
    %c0_i32_1 = arith.constant 0 : i32
    return %c0_i32, %c0_i32_0 : i32, i32
  }
  func.func @transform_6(%arg0: i32) -> (i32, i32) {
    %c0_i32 = arith.constant 0 : i32
    %c0_i32_0 = arith.constant 0 : i32
    %c0_i32_1 = arith.constant 0 : i32
    return %c0_i32, %c0_i32_0 : i32, i32
  }
  func.func @transform_7(%arg0: i32) -> (i32, i32) {
    %c0_i32 = arith.constant 0 : i32
    %c0_i32_0 = arith.constant 0 : i32
    return %arg0, %c0_i32 : i32, i32
  }
}

module attributes {stable_mosaic.version = 11 : i64} {
  func.func @multimodal_kernel(%arg0: i32, %arg1: memref<16x16xf32, #tpu.memory_space<vmem>>, %arg2: memref<16x8xf32, #tpu.memory_space<vmem>>, %arg3: memref<16x128xf32, #tpu.memory_space<vmem>>, %arg4: memref<8x128xf32, #tpu.memory_space<vmem>>, %arg5: memref<1x128xf32, #tpu.memory_space<vmem>>, %arg6: memref<128x128xf32, #tpu.memory_space<vmem>>, %arg7: memref<1x128xf32, #tpu.memory_space<vmem>>, %arg8: memref<16x128xf32, #tpu.memory_space<vmem>>) attributes {dimension_semantics = [#tpu.dimension_semantics<parallel>], iteration_bounds = array<i64: 1>, scalar_prefetch = 0 : i64, scratch_operands = 0 : i64, tpu.core_type = #tpu.core_type<tc>, window_params = [{transform_indices = @transform_0, window_bounds = array<i64: 16, 16>}, {transform_indices = @transform_1, window_bounds = array<i64: 16, 8>}, {pipeline_mode = #tpu.pipeline_mode<synchronous>, transform_indices = @transform_2, window_bounds = array<i64: 16, 128>}, {pipeline_mode = #tpu.pipeline_mode<synchronous>, transform_indices = @transform_3, window_bounds = array<i64: 8, 128>}, {pipeline_mode = #tpu.pipeline_mode<synchronous>, transform_indices = @transform_4, window_bounds = array<i64: 1, 128>}, {pipeline_mode = #tpu.pipeline_mode<synchronous>, transform_indices = @transform_5, window_bounds = array<i64: 128, 128>}, {pipeline_mode = #tpu.pipeline_mode<synchronous>, transform_indices = @transform_6, window_bounds = array<i64: 1, 128>}, {transform_indices = @transform_7, window_bounds = array<i64: 16, 128>}]} {
    %c0 = arith.constant 0 : index
    %c0_0 = arith.constant 0 : index
    %0 = vector.load %arg1[%c0, %c0_0] : memref<16x16xf32, #tpu.memory_space<vmem>>, vector<16x16xf32>
    %c0_1 = arith.constant 0 : index
    %c0_2 = arith.constant 0 : index
    %1 = vector.load %arg2[%c0_1, %c0_2] : memref<16x8xf32, #tpu.memory_space<vmem>>, vector<16x8xf32>
    %c0_3 = arith.constant 0 : index
    %c0_4 = arith.constant 0 : index
    %2 = vector.load %arg3[%c0_3, %c0_4] : memref<16x128xf32, #tpu.memory_space<vmem>>, vector<16x128xf32>
    %cst = arith.constant dense<0.000000e+00> : vector<16x128xf32>
    %3 = tpu.matmul %0, %2, %cst {dimension_numbers = #tpu.dot_dimension_numbers<[1], [0], [0], [1], [0, 0, 1, 1], [], []>} : vector<16x16xf32>, vector<16x128xf32>, vector<16x128xf32> -> vector<16x128xf32>
    %c0_5 = arith.constant 0 : index
    %c0_6 = arith.constant 0 : index
    %4 = vector.load %arg4[%c0_5, %c0_6] : memref<8x128xf32, #tpu.memory_space<vmem>>, vector<8x128xf32>
    %cst_7 = arith.constant dense<0.000000e+00> : vector<16x128xf32>
    %5 = tpu.matmul %1, %4, %cst_7 {dimension_numbers = #tpu.dot_dimension_numbers<[1], [0], [0], [1], [0, 0, 1, 1], [], []>} : vector<16x8xf32>, vector<8x128xf32>, vector<16x128xf32> -> vector<16x128xf32>
    %6 = arith.addf %3, %5 : vector<16x128xf32>
    %c0_8 = arith.constant 0 : index
    %c0_9 = arith.constant 0 : index
    %7 = vector.load %arg5[%c0_8, %c0_9] : memref<1x128xf32, #tpu.memory_space<vmem>>, vector<1x128xf32>
    %8 = vector.broadcast %7 : vector<1x128xf32> to vector<16x128xf32>
    %9 = arith.addf %6, %8 : vector<16x128xf32>
    %cst_10 = arith.constant 0.000000e+00 : f32
    %10 = vector.broadcast %cst_10 : f32 to vector<16x128xf32>
    %11 = arith.maximumf %9, %10 : vector<16x128xf32>
    %c0_11 = arith.constant 0 : index
    %c0_12 = arith.constant 0 : index
    %12 = vector.load %arg6[%c0_11, %c0_12] : memref<128x128xf32, #tpu.memory_space<vmem>>, vector<128x128xf32>
    %cst_13 = arith.constant dense<0.000000e+00> : vector<16x128xf32>
    %13 = tpu.matmul %11, %12, %cst_13 {dimension_numbers = #tpu.dot_dimension_numbers<[1], [0], [0], [1], [0, 0, 1, 1], [], []>} : vector<16x128xf32>, vector<128x128xf32>, vector<16x128xf32> -> vector<16x128xf32>
    %c0_14 = arith.constant 0 : index
    %c0_15 = arith.constant 0 : index
    %14 = vector.load %arg7[%c0_14, %c0_15] : memref<1x128xf32, #tpu.memory_space<vmem>>, vector<1x128xf32>
    %15 = vector.broadcast %14 : vector<1x128xf32> to vector<16x128xf32>
    %16 = arith.addf %13, %15 : vector<16x128xf32>
    %c0_16 = arith.constant 0 : index
    %c0_17 = arith.constant 0 : index
    %17 = vector.load %arg8[%c0_16, %c0_17] : memref<16x128xf32, #tpu.memory_space<vmem>>, vector<16x128xf32>
    tpu.vector_store %arg8[%c0_16, %c0_17], %16 {strides = array<i32>} : memref<16x128xf32, #tpu.memory_space<vmem>>, vector<16x128xf32>,
    return
  }
  func.func @transform_0(%arg0: i32) -> (i32, i32) {
    %c0_i32 = arith.constant 0 : i32
    %c0_i32_0 = arith.constant 0 : i32
    return %arg0, %c0_i32 : i32, i32
  }
  func.func @transform_1(%arg0: i32) -> (i32, i32) {
    %c0_i32 = arith.constant 0 : i32
    %c0_i32_0 = arith.constant 0 : i32
    return %arg0, %c0_i32 : i32, i32
  }
  func.func @transform_2(%arg0: i32) -> (i32, i32) {
    %c0_i32 = arith.constant 0 : i32
    %c0_i32_0 = arith.constant 0 : i32
    %c0_i32_1 = arith.constant 0 : i32
    return %c0_i32, %c0_i32_0 : i32, i32
  }
  func.func @transform_3(%arg0: i32) -> (i32, i32) {
    %c0_i32 = arith.constant 0 : i32
    %c0_i32_0 = arith.constant 0 : i32
    %c0_i32_1 = arith.constant 0 : i32
    return %c0_i32, %c0_i32_0 : i32, i32
  }
  func.func @transform_4(%arg0: i32) -> (i32, i32) {
    %c0_i32 = arith.constant 0 : i32
    %c0_i32_0 = arith.constant 0 : i32
    %c0_i32_1 = arith.constant 0 : i32
    return %c0_i32, %c0_i32_0 : i32, i32
  }
  func.func @transform_5(%arg0: i32) -> (i32, i32) {
    %c0_i32 = arith.constant 0 : i32
    %c0_i32_0 = arith.constant 0 : i32
    %c0_i32_1 = arith.constant 0 : i32
    return %c0_i32, %c0_i32_0 : i32, i32
  }
  func.func @transform_6(%arg0: i32) -> (i32, i32) {
    %c0_i32 = arith.constant 0 : i32
    %c0_i32_0 = arith.constant 0 : i32
    %c0_i32_1 = arith.constant 0 : i32
    return %c0_i32, %c0_i32_0 : i32, i32
  }
  func.func @transform_7(%arg0: i32) -> (i32, i32) {
    %c0_i32 = arith.constant 0 : i32
    %c0_i32_0 = arith.constant 0 : i32
    return %arg0, %c0_i32 : i32, i32
  }
}

</mosaic_0001>

<llo_original>
// kernel: tpu_custom_call.1
$region0: #{tpu_custom_call.1}
  #allocation0 [shape = 'u32[]', space=smem, size = 0x4, offset = 0x4, fixed_abs, tag = 'smem constant byte address 0x4 - core index']
  #allocation1 [shape = 'u32[144,128]{1,0:T(1,128)}', space=vmem, size = 0x12000, scoped, tag = 'internal scratch']
  %s0 = inlined_call_operand.vmem [shape: f32[16,16], index: 0, kind: input, shape index: {}]
  %s1 = inlined_call_operand.vmem [shape: f32[16,8], index: 1, kind: input, shape index: {}]
  %s2 = inlined_call_operand.hbm [shape: f32[16,128], index: 2, kind: input, shape index: {}]
  %s3 = inlined_call_operand.vmem [shape: f32[8,128], index: 3, kind: input, shape index: {}]
  %s4 = inlined_call_operand.vmem [shape: f32[1,128], index: 4, kind: input, shape index: {}]
  %s5 = inlined_call_operand.hbm [shape: f32[128,128], index: 5, kind: input, shape index: {}]
  %s6 = inlined_call_operand.vmem [shape: f32[1,128], index: 6, kind: input, shape index: {}]
  %s7 = inlined_call_operand.hbm [shape: f32[16,128], index: 7, kind: output, shape index: {}]
  %s8 = sld [smem:[#allocation0]]
  $region46: #{tpu_custom_call.1} parent=0
    _
  %s10 = ssub.s32 1, %s8
  %s11 = scalar_select 0, %s10, %s8
  $region1: #{tpu_custom_call.1} parent=0
    #allocation2 [shape = 'u8[8192]{0}', space=vmem, size = 0x2000, scoped, tag = 'input window, operand 2, single buffered']
    #allocation3 [shape = 's32[1]{0}', space=sflag, size = 0x4, scoped, tag = 'scoped memory for tpu_custom_call.1']
    #allocation4 [shape = 's32[1]{0}', space=sflag, size = 0x4, scoped, tag = 'scoped memory for tpu_custom_call.1']
    #allocation5 [shape = 'u8[65536]{0}', space=vmem, size = 0x10000, scoped, tag = 'input window, operand 5, single buffered']
    #allocation6 [shape = 's32[1]{0}', space=sflag, size = 0x4, scoped, tag = 'scoped memory for tpu_custom_call.1']
    #allocation7 [shape = 'u8[8192]{0}', space=vmem, size = 0x2000, scoped, tag = 'output window, operand 0, single buffered']
    %12 = vsyncpa [#allocation3], 0
    %13 = vsyncpa [#allocation6], 0
    %14 = vsyncpa [#allocation4], 0
    // Predicated region
    $region2: #{tpu_custom_call.1} parent=1 // pred_check
      _
    $region3: #{tpu_custom_call.1} parent=1 // pred_check_branch
      %16 = sbr.rel (0) target = $region5
    $region4: #{tpu_custom_call.1} parent=1 // pred_region
      _
    $region5: #{tpu_custom_call.1} parent=1 // pred_fallthru
      _
    // Predicated region
    $region6: #{tpu_custom_call.1} parent=1 // pred_check
      _
    $region7: #{tpu_custom_call.1} parent=1 // pred_check_branch
      %18 = sbr.rel (0) target = $region9
    $region8: #{tpu_custom_call.1} parent=1 // pred_region
      _
    $region9: #{tpu_custom_call.1} parent=1 // pred_fallthru
      _
    // Predicated region
    $region10: #{tpu_custom_call.1} parent=1 // pred_check
      _
    $region11: #{tpu_custom_call.1} parent=1 // pred_check_branch
      %20 = sbr.rel (0) target = $region13
    $region12: #{tpu_custom_call.1} parent=1 // pred_region
      %s22 = ssub.s32 256, 256
      %23 = vsyncadd [#allocation3], %s22
      %s24 = sshll.u32 [#allocation2], 4
      %s25 = int_to_ptr.vmem [resolvable:$true] %s24
      %30 = dma.hbm_to_vmem [thread:$0]  %s2, 256, %s25, [#allocation3], 128, 128, 8
    $region13: #{tpu_custom_call.1} parent=1 // pred_fallthru
      _
    // Predicated region
    $region14: #{tpu_custom_call.1} parent=1 // pred_check
      _
    $region15: #{tpu_custom_call.1} parent=1 // pred_check_branch
      %32 = sbr.rel (0) target = $region17
    $region16: #{tpu_custom_call.1} parent=1 // pred_region
      _
    $region17: #{tpu_custom_call.1} parent=1 // pred_fallthru
      _
    // Predicated region
    $region18: #{tpu_custom_call.1} parent=1 // pred_check
      _
    $region19: #{tpu_custom_call.1} parent=1 // pred_check_branch
      %34 = sbr.rel (0) target = $region21
    $region20: #{tpu_custom_call.1} parent=1 // pred_region
      _
    $region21: #{tpu_custom_call.1} parent=1 // pred_fallthru
      _
    // Predicated region
    $region22: #{tpu_custom_call.1} parent=1 // pred_check
      _
    $region23: #{tpu_custom_call.1} parent=1 // pred_check_branch
      %36 = sbr.rel (0) target = $region25
    $region24: #{tpu_custom_call.1} parent=1 // pred_region
      %s38 = ssub.s32 2048, 2048
      %39 = vsyncadd [#allocation6], %s38
      %s40 = sshll.u32 [#allocation5], 4
      %s41 = int_to_ptr.vmem [resolvable:$true] %s40
      %46 = dma.hbm_to_vmem [thread:$0]  %s5, 2048, %s41, [#allocation6], 128, 128, 8
    $region25: #{tpu_custom_call.1} parent=1 // pred_fallthru
      _
    // Predicated region
    $region26: #{tpu_custom_call.1} parent=1 // pred_check
      _
    $region27: #{tpu_custom_call.1} parent=1 // pred_check_branch
      %48 = sbr.rel (0) target = $region29
    $region28: #{tpu_custom_call.1} parent=1 // pred_region
      _
    $region29: #{tpu_custom_call.1} parent=1 // pred_fallthru
      _
    // Predicated region
    $region30: #{tpu_custom_call.1} parent=1 // pred_check
      _
    $region31: #{tpu_custom_call.1} parent=1 // pred_check_branch
      %50 = sbr.rel (0) target = $region33
    $region32: #{tpu_custom_call.1} parent=1 // pred_region
      %51 = dma.done [#allocation3], 256
    $region33: #{tpu_custom_call.1} parent=1 // pred_fallthru
      _
    // Predicated region
    $region34: #{tpu_custom_call.1} parent=1 // pred_check
      _
    $region35: #{tpu_custom_call.1} parent=1 // pred_check_branch
      %53 = sbr.rel (0) target = $region37
    $region36: #{tpu_custom_call.1} parent=1 // pred_region
      %54 = dma.done [#allocation6], 2048
    $region37: #{tpu_custom_call.1} parent=1 // pred_fallthru
      _
    %v55 = vld [vmem:[%s0] sm:$0xff]
    %v56 = vld [vmem:[%s0 + $0x8] sm:$0xff]
    %v57 = vld [vmem:[%s1] sm:$0xff]
    %v58 = vld [vmem:[%s1 + $0x8] sm:$0xff]
    %v59 = vld [vmem:[#allocation2] sm:$0xff]
    %v60 = vld [vmem:[#allocation2 + $0x8] sm:$0xff]
    %v61 = vld [vmem:[%s3] sm:$0xff]
    %vm62 = vcmask 64512
    %v64 = vsel %vm62, %v57, 0
    %v67 = vsel %vm62, %v58, 0
    %69 = vmatprep.subr.mxu0 0.0
    %70 = vmatpush1.msra.mxu0 %v61
    %71 = vmatprep.subr.mxu0 0.0
    %72 = vmatpush1.msra.mxu0 0.0
    %73 = vmatprep.subr.mxu0 0.0
    %74 = vmatpush1.msra.mxu0 0.0
    %75 = vmatprep.subr.mxu0 0.0
    %76 = vmatpush1.msra.mxu0 0.0
    %77 = vmatprep.subr.mxu0 0.0
    %78 = vmatpush1.msra.mxu0 0.0
    %79 = vmatprep.subr.mxu0 0.0
    %80 = vmatpush1.msra.mxu0 0.0
    %81 = vmatprep.subr.mxu0 0.0
    %82 = vmatpush1.msra.mxu0 0.0
    %83 = vmatprep.subr.mxu0 0.0
    %84 = vmatpush1.msra.mxu0 0.0
    %85 = vmatprep.subr.mxu0 0.0
    %86 = vmatpush1.msra.mxu0 0.0
    %87 = vmatprep.subr.mxu0 0.0
    %88 = vmatpush1.msra.mxu0 0.0
    %89 = vmatprep.subr.mxu0 0.0
    %90 = vmatpush1.msra.mxu0 0.0
    %91 = vmatprep.subr.mxu0 0.0
    %92 = vmatpush1.msra.mxu0 0.0
    %93 = vmatprep.subr.mxu0 0.0
    %94 = vmatpush1.msra.mxu0 0.0
    %95 = vmatprep.subr.mxu0 0.0
    %96 = vmatpush1.msra.mxu0 0.0
    %97 = vmatprep.subr.mxu0 0.0
    %98 = vmatpush1.msra.mxu0 0.0
    %99 = vmatprep.subr.mxu0 0.0
    %100 = vmatpush1.msra.mxu0 0.0
    %101 = vmatprep.subr.mxu0 0.0
    %102 = vmatpush1.msra.mxu0 0.0
    %103 = vmatprep.subr.mxu0 0.0
    %104 = vmatpush1.msra.mxu0 0.0
    %105 = vmatprep.subr.mxu0 0.0
    %106 = vmatpush1.msra.mxu0 0.0
    %107 = vmatprep.subr.mxu0 0.0
    %108 = vmatpush1.msra.mxu0 0.0
    %109 = vmatprep.subr.mxu0 0.0
    %110 = vmatpush1.msra.mxu0 0.0
    %111 = vmatprep.subr.mxu0 0.0
    %112 = vmatpush1.msra.mxu0 0.0
    %113 = vmatprep.subr.mxu0 0.0
    %114 = vmatpush1.msra.mxu0 0.0
    %115 = vmatprep.subr.mxu0 0.0
    %116 = vmatpush1.msra.mxu0 0.0
    %117 = vmatprep.subr.mxu0 0.0
    %118 = vmatpush1.msra.mxu0 0.0
    %119 = vmatprep.subr.mxu0 0.0
    %120 = vmatpush1.msra.mxu0 0.0
    %121 = vmatprep.subr.mxu0 0.0
    %122 = vmatpush1.msra.mxu0 0.0
    %123 = vmatprep.subr.mxu0 0.0
    %124 = vmatpush1.msra.mxu0 0.0
    %125 = vmatprep.subr.mxu0 0.0
    %126 = vmatpush1.msra.mxu0 0.0
    %127 = vmatprep.subr.mxu0 0.0
    %128 = vmatpush1.msra.mxu0 0.0
    %129 = vmatprep.subr.mxu0 0.0
    %130 = vmatpush1.msra.mxu0 0.0
    %131 = vmatprep.subr.mxu0 0.0
    %132 = vmatpush1.msra.mxu0 0.0
    %133 = vmatprep.mubr.f32.mxu0 0.0
    %134 = vmatmul.mubr.f32.gmra.mrb[0].mxu0 %v64
    %v135 = vpop.f32.mrb[0].mxu0
    %v136 = vadd.f32 0.0, %v135
    %v137 = vpop.f32.mrb[0].mxu0
    %138 = vmatprep.mubr.f32.mxu0 0.0
    %139 = vmatmul.mubr.f32.gmra.mrb[0].mxu0 %v67
    %v140 = vpop.f32.mrb[0].mxu0
    %v141 = vadd.f32 0.0, %v140
    %v142 = vpop.f32.mrb[0].mxu0
    %143 = vdwg.mxu0
    %vm144 = vcmask 130048
    %v146 = vsel %vm144, %v55, 0
    %v149 = vsel %vm144, %v56, 0
    %151 = vmatprep.subr.mxu0 0.0
    %152 = vmatpush1.msra.mxu0 %v59
    %153 = vmatprep.subr.mxu0 0.0
    %154 = vmatpush1.msra.mxu0 %v60
    %155 = vmatprep.subr.mxu0 0.0
    %156 = vmatpush1.msra.mxu0 0.0
    %157 = vmatprep.subr.mxu0 0.0
    %158 = vmatpush1.msra.mxu0 0.0
    %159 = vmatprep.subr.mxu0 0.0
    %160 = vmatpush1.msra.mxu0 0.0
    %161 = vmatprep.subr.mxu0 0.0
    %162 = vmatpush1.msra.mxu0 0.0
    %163 = vmatprep.subr.mxu0 0.0
    %164 = vmatpush1.msra.mxu0 0.0
    %165 = vmatprep.subr.mxu0 0.0
    %166 = vmatpush1.msra.mxu0 0.0
    %167 = vmatprep.subr.mxu0 0.0
    %168 = vmatpush1.msra.mxu0 0.0
    %169 = vmatprep.subr.mxu0 0.0
    %170 = vmatpush1.msra.mxu0 0.0
    %171 = vmatprep.subr.mxu0 0.0
    %172 = vmatpush1.msra.mxu0 0.0
    %173 = vmatprep.subr.mxu0 0.0
    %174 = vmatpush1.msra.mxu0 0.0
    %175 = vmatprep.subr.mxu0 0.0
    %176 = vmatpush1.msra.mxu0 0.0
    %177 = vmatprep.subr.mxu0 0.0
    %178 = vmatpush1.msra.mxu0 0.0
    %179 = vmatprep.subr.mxu0 0.0
    %180 = vmatpush1.msra.mxu0 0.0
    %181 = vmatprep.subr.mxu0 0.0
    %182 = vmatpush1.msra.mxu0 0.0
    %183 = vmatprep.subr.mxu0 0.0
    %184 = vmatpush1.msra.mxu0 0.0
    %185 = vmatprep.subr.mxu0 0.0
    %186 = vmatpush1.msra.mxu0 0.0
    %187 = vmatprep.subr.mxu0 0.0
    %188 = vmatpush1.msra.mxu0 0.0
    %189 = vmatprep.subr.mxu0 0.0
    %190 = vmatpush1.msra.mxu0 0.0
    %191 = vmatprep.subr.mxu0 0.0
    %192 = vmatpush1.msra.mxu0 0.0
    %193 = vmatprep.subr.mxu0 0.0
    %194 = vmatpush1.msra.mxu0 0.0
    %195 = vmatprep.subr.mxu0 0.0
    %196 = vmatpush1.msra.mxu0 0.0
    %197 = vmatprep.subr.mxu0 0.0
    %198 = vmatpush1.msra.mxu0 0.0
    %199 = vmatprep.subr.mxu0 0.0
    %200 = vmatpush1.msra.mxu0 0.0
    %201 = vmatprep.subr.mxu0 0.0
    %202 = vmatpush1.msra.mxu0 0.0
    %203 = vmatprep.subr.mxu0 0.0
    %204 = vmatpush1.msra.mxu0 0.0
    %205 = vmatprep.subr.mxu0 0.0
    %206 = vmatpush1.msra.mxu0 0.0
    %207 = vmatprep.subr.mxu0 0.0
    %208 = vmatpush1.msra.mxu0 0.0
    %209 = vmatprep.subr.mxu0 0.0
    %210 = vmatpush1.msra.mxu0 0.0
    %211 = vmatprep.subr.mxu0 0.0
    %212 = vmatpush1.msra.mxu0 0.0
    %213 = vmatprep.subr.mxu0 0.0
    %214 = vmatpush1.msra.mxu0 0.0
    %215 = vmatprep.mubr.f32.mxu0 0.0
    %216 = vmatmul.mubr.f32.gmra.mrb[0].mxu0 %v146
    %v217 = vpop.f32.mrb[0].mxu0
    %v218 = vadd.f32 %v136, %v217
    %v219 = vpop.f32.mrb[0].mxu0
    %220 = vmatprep.mubr.f32.mxu0 0.0
    %221 = vmatmul.mubr.f32.gmra.mrb[0].mxu0 %v149
    %v222 = vpop.f32.mrb[0].mxu0
    %v223 = vadd.f32 %v141, %v222
    %v224 = vpop.f32.mrb[0].mxu0
    %225 = vdwg.mxu0
    %v226 = vld [vmem:[%s4] sm:$0x1]
    %v228 = vlaneseq
    %v229 = vshrl.u32 %v228, 7
    %v230 = vsub.s32 0, %v229
    %v231 = vrot.slane %v226, %v230
    %v233 = vadd.f32 %v218, %v231
    %v234 = vadd.f32 %v223, %v231
    %v235 = vmax.f32 %v233, 0.0
    %v236 = vmax.f32 %v234, 0.0
    %v237 = vld [vmem:[#allocation5] sm:$0xff]
    %v238 = vld [vmem:[#allocation5 + $0x8] sm:$0xff]
    %v239 = vld [vmem:[#allocation5 + $0x10] sm:$0xff]
    %v240 = vld [vmem:[#allocation5 + $0x18] sm:$0xff]
    %v241 = vld [vmem:[#allocation5 + $0x20] sm:$0xff]
    %v242 = vld [vmem:[#allocation5 + $0x28] sm:$0xff]
    %v243 = vld [vmem:[#allocation5 + $0x30] sm:$0xff]
    %v244 = vld [vmem:[#allocation5 + $0x38] sm:$0xff]
    %v245 = vld [vmem:[#allocation5 + $0x40] sm:$0xff]
    %v246 = vld [vmem:[#allocation5 + $0x48] sm:$0xff]
    %v247 = vld [vmem:[#allocation5 + $0x50] sm:$0xff]
    %v248 = vld [vmem:[#allocation5 + $0x58] sm:$0xff]
    %v249 = vld [vmem:[#allocation5 + $0x60] sm:$0xff]
    %v250 = vld [vmem:[#allocation5 + $0x68] sm:$0xff]
    %v251 = vld [vmem:[#allocation5 + $0x70] sm:$0xff]
    %v252 = vld [vmem:[#allocation5 + $0x78] sm:$0xff]
    %v253 = vld [vmem:[%s6] sm:$0x1]
    %v255 = vlaneseq
    %v256 = vshrl.u32 %v255, 7
    %v257 = vsub.s32 0, %v256
    %v258 = vrot.slane %v253, %v257
    %260 = vmatprep.subr.mxu0 0.0
    %261 = vmatpush1.msra.mxu0 %v237
    %262 = vmatprep.subr.mxu0 0.0
    %263 = vmatpush1.msra.mxu0 %v238
    %264 = vmatprep.subr.mxu0 0.0
    %265 = vmatpush1.msra.mxu0 %v239
    %266 = vmatprep.subr.mxu0 0.0
    %267 = vmatpush1.msra.mxu0 %v240
    %268 = vmatprep.subr.mxu0 0.0
    %269 = vmatpush1.msra.mxu0 %v241
    %270 = vmatprep.subr.mxu0 0.0
    %271 = vmatpush1.msra.mxu0 %v242
    %272 = vmatprep.subr.mxu0 0.0
    %273 = vmatpush1.msra.mxu0 %v243
    %274 = vmatprep.subr.mxu0 0.0
    %275 = vmatpush1.msra.mxu0 %v244
    %276 = vmatprep.subr.mxu0 0.0
    %277 = vmatpush1.msra.mxu0 %v245
    %278 = vmatprep.subr.mxu0 0.0
    %279 = vmatpush1.msra.mxu0 %v246
    %280 = vmatprep.subr.mxu0 0.0
    %281 = vmatpush1.msra.mxu0 %v247
    %282 = vmatprep.subr.mxu0 0.0
    %283 = vmatpush1.msra.mxu0 %v248
    %284 = vmatprep.subr.mxu0 0.0
    %285 = vmatpush1.msra.mxu0 %v249
    %286 = vmatprep.subr.mxu0 0.0
    %287 = vmatpush1.msra.mxu0 %v250
    %288 = vmatprep.subr.mxu0 0.0
    %289 = vmatpush1.msra.mxu0 %v251
    %290 = vmatprep.subr.mxu0 0.0
    %291 = vmatpush1.msra.mxu0 %v252
    %292 = vmatprep.subr.mxu0 0.0
    %293 = vmatpush1.msra.mxu0 0.0
    %294 = vmatprep.subr.mxu0 0.0
    %295 = vmatpush1.msra.mxu0 0.0
    %296 = vmatprep.subr.mxu0 0.0
    %297 = vmatpush1.msra.mxu0 0.0
    %298 = vmatprep.subr.mxu0 0.0
    %299 = vmatpush1.msra.mxu0 0.0
    %300 = vmatprep.subr.mxu0 0.0
    %301 = vmatpush1.msra.mxu0 0.0
    %302 = vmatprep.subr.mxu0 0.0
    %303 = vmatpush1.msra.mxu0 0.0
    %304 = vmatprep.subr.mxu0 0.0
    %305 = vmatpush1.msra.mxu0 0.0
    %306 = vmatprep.subr.mxu0 0.0
    %307 = vmatpush1.msra.mxu0 0.0
    %308 = vmatprep.subr.mxu0 0.0
    %309 = vmatpush1.msra.mxu0 0.0
    %310 = vmatprep.subr.mxu0 0.0
    %311 = vmatpush1.msra.mxu0 0.0
    %312 = vmatprep.subr.mxu0 0.0
    %313 = vmatpush1.msra.mxu0 0.0
    %314 = vmatprep.subr.mxu0 0.0
    %315 = vmatpush1.msra.mxu0 0.0
    %316 = vmatprep.subr.mxu0 0.0
    %317 = vmatpush1.msra.mxu0 0.0
    %318 = vmatprep.subr.mxu0 0.0
    %319 = vmatpush1.msra.mxu0 0.0
    %320 = vmatprep.subr.mxu0 0.0
    %321 = vmatpush1.msra.mxu0 0.0
    %322 = vmatprep.subr.mxu0 0.0
    %323 = vmatpush1.msra.mxu0 0.0
    %324 = vmatprep.mubr.f32.mxu0 0.0
    %325 = vmatmul.mubr.f32.gmra.mrb[0].mxu0 %v235
    %v326 = vpop.f32.mrb[0].mxu0
    %v327 = vadd.f32 %v258, %v326
    %v328 = vpop.f32.mrb[0].mxu0
    %329 = vmatprep.mubr.f32.mxu0 0.0
    %330 = vmatmul.mubr.f32.gmra.mrb[0].mxu0 %v236
    %v331 = vpop.f32.mrb[0].mxu0
    %v332 = vadd.f32 %v258, %v331
    %v333 = vpop.f32.mrb[0].mxu0
    %334 = vdwg.mxu0
    %335 = vst [vmem:[#allocation7] sm:$0xff] %v327
    %336 = vst [vmem:[#allocation7 + $0x8] sm:$0xff] %v332
    // Predicated region
    $region38: #{tpu_custom_call.1} parent=1 // pred_check
      _
    $region39: #{tpu_custom_call.1} parent=1 // pred_check_branch
      %338 = sbr.rel (0) target = $region41
    $region40: #{tpu_custom_call.1} parent=1 // pred_region
      %s340 = ssub.s32 256, 256
      %341 = vsyncadd [#allocation4], %s340
      %s342 = sshll.u32 [#allocation7], 4
      %s343 = int_to_ptr.vmem [resolvable:$true] %s342
      %348 = dma.vmem_to_hbm [thread:$0]  %s343, 256, %s7, [#allocation4], 128, 128, 8
    $region41: #{tpu_custom_call.1} parent=1 // pred_fallthru
      _
    // Predicated region
    $region42: #{tpu_custom_call.1} parent=1 // pred_check
      _
    $region43: #{tpu_custom_call.1} parent=1 // pred_check_branch
      %350 = sbr.rel (0) target = $region45
    $region44: #{tpu_custom_call.1} parent=1 // pred_region
      %351 = dma.done [#allocation4], 256
    $region45: #{tpu_custom_call.1} parent=1 // pred_fallthru
      _
    %352 = vsyncpa [#allocation3], 1
    %353 = vsyncpa [#allocation6], 1
    %354 = vsyncpa [#allocation4], 1

// kernel: tpu_custom_call.1
$region0: #{tpu_custom_call.1}
  #allocation0 [shape = 'u32[]', space=smem, size = 0x4, offset = 0x4, fixed_abs, tag = 'smem constant byte address 0x4 - core index']
  #allocation1 [shape = 'u32[144,128]{1,0:T(1,128)}', space=vmem, size = 0x12000, scoped, tag = 'internal scratch']
  %s0 = inlined_call_operand.vmem [shape: f32[16,16], index: 0, kind: input, shape index: {}]
  %s1 = inlined_call_operand.vmem [shape: f32[16,8], index: 1, kind: input, shape index: {}]
  %s2 = inlined_call_operand.hbm [shape: f32[16,128], index: 2, kind: input, shape index: {}]
  %s3 = inlined_call_operand.vmem [shape: f32[8,128], index: 3, kind: input, shape index: {}]
  %s4 = inlined_call_operand.vmem [shape: f32[1,128], index: 4, kind: input, shape index: {}]
  %s5 = inlined_call_operand.hbm [shape: f32[128,128], index: 5, kind: input, shape index: {}]
  %s6 = inlined_call_operand.vmem [shape: f32[1,128], index: 6, kind: input, shape index: {}]
  %s7 = inlined_call_operand.hbm [shape: f32[16,128], index: 7, kind: output, shape index: {}]
  %s8 = sld [smem:[#allocation0]]
  $region46: #{tpu_custom_call.1} parent=0
    _
  %s10 = ssub.s32 1, %s8
  %s11 = scalar_select 0, %s10, %s8
  $region1: #{tpu_custom_call.1} parent=0
    #allocation2 [shape = 'u8[8192]{0}', space=vmem, size = 0x2000, scoped, tag = 'input window, operand 2, single buffered']
    #allocation3 [shape = 's32[1]{0}', space=sflag, size = 0x4, scoped, tag = 'scoped memory for tpu_custom_call.1']
    #allocation4 [shape = 's32[1]{0}', space=sflag, size = 0x4, scoped, tag = 'scoped memory for tpu_custom_call.1']
    #allocation5 [shape = 'u8[65536]{0}', space=vmem, size = 0x10000, scoped, tag = 'input window, operand 5, single buffered']
    #allocation6 [shape = 's32[1]{0}', space=sflag, size = 0x4, scoped, tag = 'scoped memory for tpu_custom_call.1']
    #allocation7 [shape = 'u8[8192]{0}', space=vmem, size = 0x2000, scoped, tag = 'output window, operand 0, single buffered']
    %12 = vsyncpa [#allocation3], 0
    %13 = vsyncpa [#allocation6], 0
    %14 = vsyncpa [#allocation4], 0
    // Predicated region
    $region2: #{tpu_custom_call.1} parent=1 // pred_check
      _
    $region3: #{tpu_custom_call.1} parent=1 // pred_check_branch
      %16 = sbr.rel (0) target = $region5
    $region4: #{tpu_custom_call.1} parent=1 // pred_region
      _
    $region5: #{tpu_custom_call.1} parent=1 // pred_fallthru
      _
    // Predicated region
    $region6: #{tpu_custom_call.1} parent=1 // pred_check
      _
    $region7: #{tpu_custom_call.1} parent=1 // pred_check_branch
      %18 = sbr.rel (0) target = $region9
    $region8: #{tpu_custom_call.1} parent=1 // pred_region
      _
    $region9: #{tpu_custom_call.1} parent=1 // pred_fallthru
      _
    // Predicated region
    $region10: #{tpu_custom_call.1} parent=1 // pred_check
      _
    $region11: #{tpu_custom_call.1} parent=1 // pred_check_branch
      %20 = sbr.rel (0) target = $region13
    $region12: #{tpu_custom_call.1} parent=1 // pred_region
      %s22 = ssub.s32 256, 256
      %23 = vsyncadd [#allocation3], %s22
      %s24 = sshll.u32 [#allocation2], 4
      %s25 = int_to_ptr.vmem [resolvable:$true] %s24
      %30 = dma.hbm_to_vmem [thread:$0]  %s2, 256, %s25, [#allocation3], 128, 128, 8
    $region13: #{tpu_custom_call.1} parent=1 // pred_fallthru
      _
    // Predicated region
    $region14: #{tpu_custom_call.1} parent=1 // pred_check
      _
    $region15: #{tpu_custom_call.1} parent=1 // pred_check_branch
      %32 = sbr.rel (0) target = $region17
    $region16: #{tpu_custom_call.1} parent=1 // pred_region
      _
    $region17: #{tpu_custom_call.1} parent=1 // pred_fallthru
      _
    // Predicated region
    $region18: #{tpu_custom_call.1} parent=1 // pred_check
      _
    $region19: #{tpu_custom_call.1} parent=1 // pred_check_branch
      %34 = sbr.rel (0) target = $region21
    $region20: #{tpu_custom_call.1} parent=1 // pred_region
      _
    $region21: #{tpu_custom_call.1} parent=1 // pred_fallthru
      _
    // Predicated region
    $region22: #{tpu_custom_call.1} parent=1 // pred_check
      _
    $region23: #{tpu_custom_call.1} parent=1 // pred_check_branch
      %36 = sbr.rel (0) target = $region25
    $region24: #{tpu_custom_call.1} parent=1 // pred_region
      %s38 = ssub.s32 2048, 2048
      %39 = vsyncadd [#allocation6], %s38
      %s40 = sshll.u32 [#allocation5], 4
      %s41 = int_to_ptr.vmem [resolvable:$true] %s40
      %46 = dma.hbm_to_vmem [thread:$0]  %s5, 2048, %s41, [#allocation6], 128, 128, 8
    $region25: #{tpu_custom_call.1} parent=1 // pred_fallthru
      _
    // Predicated region
    $region26: #{tpu_custom_call.1} parent=1 // pred_check
      _
    $region27: #{tpu_custom_call.1} parent=1 // pred_check_branch
      %48 = sbr.rel (0) target = $region29
    $region28: #{tpu_custom_call.1} parent=1 // pred_region
      _
    $region29: #{tpu_custom_call.1} parent=1 // pred_fallthru
      _
    // Predicated region
    $region30: #{tpu_custom_call.1} parent=1 // pred_check
      _
    $region31: #{tpu_custom_call.1} parent=1 // pred_check_branch
      %50 = sbr.rel (0) target = $region33
    $region32: #{tpu_custom_call.1} parent=1 // pred_region
      %51 = dma.done [#allocation3], 256
    $region33: #{tpu_custom_call.1} parent=1 // pred_fallthru
      _
    // Predicated region
    $region34: #{tpu_custom_call.1} parent=1 // pred_check
      _
    $region35: #{tpu_custom_call.1} parent=1 // pred_check_branch
      %53 = sbr.rel (0) target = $region37
    $region36: #{tpu_custom_call.1} parent=1 // pred_region
      %54 = dma.done [#allocation6], 2048
    $region37: #{tpu_custom_call.1} parent=1 // pred_fallthru
      _
    %v55 = vld [vmem:[%s0] sm:$0xff]
    %v56 = vld [vmem:[%s0 + $0x8] sm:$0xff]
    %v57 = vld [vmem:[%s1] sm:$0xff]
    %v58 = vld [vmem:[%s1 + $0x8] sm:$0xff]
    %v59 = vld [vmem:[#allocation2] sm:$0xff]
    %v60 = vld [vmem:[#allocation2 + $0x8] sm:$0xff]
    %v61 = vld [vmem:[%s3] sm:$0xff]
    %vm62 = vcmask 64512
    %v64 = vsel %vm62, %v57, 0
    %v67 = vsel %vm62, %v58, 0
    %69 = vmatprep.subr.mxu0 0.0
    %70 = vmatpush1.msra.mxu0 %v61
    %71 = vmatprep.subr.mxu0 0.0
    %72 = vmatpush1.msra.mxu0 0.0
    %73 = vmatprep.subr.mxu0 0.0
    %74 = vmatpush1.msra.mxu0 0.0
    %75 = vmatprep.subr.mxu0 0.0
    %76 = vmatpush1.msra.mxu0 0.0
    %77 = vmatprep.subr.mxu0 0.0
    %78 = vmatpush1.msra.mxu0 0.0
    %79 = vmatprep.subr.mxu0 0.0
    %80 = vmatpush1.msra.mxu0 0.0
    %81 = vmatprep.subr.mxu0 0.0
    %82 = vmatpush1.msra.mxu0 0.0
    %83 = vmatprep.subr.mxu0 0.0
    %84 = vmatpush1.msra.mxu0 0.0
    %85 = vmatprep.subr.mxu0 0.0
    %86 = vmatpush1.msra.mxu0 0.0
    %87 = vmatprep.subr.mxu0 0.0
    %88 = vmatpush1.msra.mxu0 0.0
    %89 = vmatprep.subr.mxu0 0.0
    %90 = vmatpush1.msra.mxu0 0.0
    %91 = vmatprep.subr.mxu0 0.0
    %92 = vmatpush1.msra.mxu0 0.0
    %93 = vmatprep.subr.mxu0 0.0
    %94 = vmatpush1.msra.mxu0 0.0
    %95 = vmatprep.subr.mxu0 0.0
    %96 = vmatpush1.msra.mxu0 0.0
    %97 = vmatprep.subr.mxu0 0.0
    %98 = vmatpush1.msra.mxu0 0.0
    %99 = vmatprep.subr.mxu0 0.0
    %100 = vmatpush1.msra.mxu0 0.0
    %101 = vmatprep.subr.mxu0 0.0
    %102 = vmatpush1.msra.mxu0 0.0
    %103 = vmatprep.subr.mxu0 0.0
    %104 = vmatpush1.msra.mxu0 0.0
    %105 = vmatprep.subr.mxu0 0.0
    %106 = vmatpush1.msra.mxu0 0.0
    %107 = vmatprep.subr.mxu0 0.0
    %108 = vmatpush1.msra.mxu0 0.0
    %109 = vmatprep.subr.mxu0 0.0
    %110 = vmatpush1.msra.mxu0 0.0
    %111 = vmatprep.subr.mxu0 0.0
    %112 = vmatpush1.msra.mxu0 0.0
    %113 = vmatprep.subr.mxu0 0.0
    %114 = vmatpush1.msra.mxu0 0.0
    %115 = vmatprep.subr.mxu0 0.0
    %116 = vmatpush1.msra.mxu0 0.0
    %117 = vmatprep.subr.mxu0 0.0
    %118 = vmatpush1.msra.mxu0 0.0
    %119 = vmatprep.subr.mxu0 0.0
    %120 = vmatpush1.msra.mxu0 0.0
    %121 = vmatprep.subr.mxu0 0.0
    %122 = vmatpush1.msra.mxu0 0.0
    %123 = vmatprep.subr.mxu0 0.0
    %124 = vmatpush1.msra.mxu0 0.0
    %125 = vmatprep.subr.mxu0 0.0
    %126 = vmatpush1.msra.mxu0 0.0
    %127 = vmatprep.subr.mxu0 0.0
    %128 = vmatpush1.msra.mxu0 0.0
    %129 = vmatprep.subr.mxu0 0.0
    %130 = vmatpush1.msra.mxu0 0.0
    %131 = vmatprep.subr.mxu0 0.0
    %132 = vmatpush1.msra.mxu0 0.0
    %133 = vmatprep.mubr.f32.mxu0 0.0
    %134 = vmatmul.mubr.f32.gmra.mrb[0].mxu0 %v64
    %v135 = vpop.f32.mrb[0].mxu0
    %v136 = vadd.f32 0.0, %v135
    %v137 = vpop.f32.mrb[0].mxu0
    %138 = vmatprep.mubr.f32.mxu0 0.0
    %139 = vmatmul.mubr.f32.gmra.mrb[0].mxu0 %v67
    %v140 = vpop.f32.mrb[0].mxu0
    %v141 = vadd.f32 0.0, %v140
    %v142 = vpop.f32.mrb[0].mxu0
    %143 = vdwg.mxu0
    %vm144 = vcmask 130048
    %v146 = vsel %vm144, %v55, 0
    %v149 = vsel %vm144, %v56, 0
    %151 = vmatprep.subr.mxu0 0.0
    %152 = vmatpush1.msra.mxu0 %v59
    %153 = vmatprep.subr.mxu0 0.0
    %154 = vmatpush1.msra.mxu0 %v60
    %155 = vmatprep.subr.mxu0 0.0
    %156 = vmatpush1.msra.mxu0 0.0
    %157 = vmatprep.subr.mxu0 0.0
    %158 = vmatpush1.msra.mxu0 0.0
    %159 = vmatprep.subr.mxu0 0.0
    %160 = vmatpush1.msra.mxu0 0.0
    %161 = vmatprep.subr.mxu0 0.0
    %162 = vmatpush1.msra.mxu0 0.0
    %163 = vmatprep.subr.mxu0 0.0
    %164 = vmatpush1.msra.mxu0 0.0
    %165 = vmatprep.subr.mxu0 0.0
    %166 = vmatpush1.msra.mxu0 0.0
    %167 = vmatprep.subr.mxu0 0.0
    %168 = vmatpush1.msra.mxu0 0.0
    %169 = vmatprep.subr.mxu0 0.0
    %170 = vmatpush1.msra.mxu0 0.0
    %171 = vmatprep.subr.mxu0 0.0
    %172 = vmatpush1.msra.mxu0 0.0
    %173 = vmatprep.subr.mxu0 0.0
    %174 = vmatpush1.msra.mxu0 0.0
    %175 = vmatprep.subr.mxu0 0.0
    %176 = vmatpush1.msra.mxu0 0.0
    %177 = vmatprep.subr.mxu0 0.0
    %178 = vmatpush1.msra.mxu0 0.0
    %179 = vmatprep.subr.mxu0 0.0
    %180 = vmatpush1.msra.mxu0 0.0
    %181 = vmatprep.subr.mxu0 0.0
    %182 = vmatpush1.msra.mxu0 0.0
    %183 = vmatprep.subr.mxu0 0.0
    %184 = vmatpush1.msra.mxu0 0.0
    %185 = vmatprep.subr.mxu0 0.0
    %186 = vmatpush1.msra.mxu0 0.0
    %187 = vmatprep.subr.mxu0 0.0
    %188 = vmatpush1.msra.mxu0 0.0
    %189 = vmatprep.subr.mxu0 0.0
    %190 = vmatpush1.msra.mxu0 0.0
    %191 = vmatprep.subr.mxu0 0.0
    %192 = vmatpush1.msra.mxu0 0.0
    %193 = vmatprep.subr.mxu0 0.0
    %194 = vmatpush1.msra.mxu0 0.0
    %195 = vmatprep.subr.mxu0 0.0
    %196 = vmatpush1.msra.mxu0 0.0
    %197 = vmatprep.subr.mxu0 0.0
    %198 = vmatpush1.msra.mxu0 0.0
    %199 = vmatprep.subr.mxu0 0.0
    %200 = vmatpush1.msra.mxu0 0.0
    %201 = vmatprep.subr.mxu0 0.0
    %202 = vmatpush1.msra.mxu0 0.0
    %203 = vmatprep.subr.mxu0 0.0
    %204 = vmatpush1.msra.mxu0 0.0
    %205 = vmatprep.subr.mxu0 0.0
    %206 = vmatpush1.msra.mxu0 0.0
    %207 = vmatprep.subr.mxu0 0.0
    %208 = vmatpush1.msra.mxu0 0.0
    %209 = vmatprep.subr.mxu0 0.0
    %210 = vmatpush1.msra.mxu0 0.0
    %211 = vmatprep.subr.mxu0 0.0
    %212 = vmatpush1.msra.mxu0 0.0
    %213 = vmatprep.subr.mxu0 0.0
    %214 = vmatpush1.msra.mxu0 0.0
    %215 = vmatprep.mubr.f32.mxu0 0.0
    %216 = vmatmul.mubr.f32.gmra.mrb[0].mxu0 %v146
    %v217 = vpop.f32.mrb[0].mxu0
    %v218 = vadd.f32 %v136, %v217
    %v219 = vpop.f32.mrb[0].mxu0
    %220 = vmatprep.mubr.f32.mxu0 0.0
    %221 = vmatmul.mubr.f32.gmra.mrb[0].mxu0 %v149
    %v222 = vpop.f32.mrb[0].mxu0
    %v223 = vadd.f32 %v141, %v222
    %v224 = vpop.f32.mrb[0].mxu0
    %225 = vdwg.mxu0
    %v226 = vld [vmem:[%s4] sm:$0x1]
    %v228 = vlaneseq
    %v229 = vshrl.u32 %v228, 7
    %v230 = vsub.s32 0, %v229
    %v231 = vrot.slane %v226, %v230
    %v233 = vadd.f32 %v218, %v231
    %v234 = vadd.f32 %v223, %v231
    %v235 = vmax.f32 %v233, 0.0
    %v236 = vmax.f32 %v234, 0.0
    %v237 = vld [vmem:[#allocation5] sm:$0xff]
    %v238 = vld [vmem:[#allocation5 + $0x8] sm:$0xff]
    %v239 = vld [vmem:[#allocation5 + $0x10] sm:$0xff]
    %v240 = vld [vmem:[#allocation5 + $0x18] sm:$0xff]
    %v241 = vld [vmem:[#allocation5 + $0x20] sm:$0xff]
    %v242 = vld [vmem:[#allocation5 + $0x28] sm:$0xff]
    %v243 = vld [vmem:[#allocation5 + $0x30] sm:$0xff]
    %v244 = vld [vmem:[#allocation5 + $0x38] sm:$0xff]
    %v245 = vld [vmem:[#allocation5 + $0x40] sm:$0xff]
    %v246 = vld [vmem:[#allocation5 + $0x48] sm:$0xff]
    %v247 = vld [vmem:[#allocation5 + $0x50] sm:$0xff]
    %v248 = vld [vmem:[#allocation5 + $0x58] sm:$0xff]
    %v249 = vld [vmem:[#allocation5 + $0x60] sm:$0xff]
    %v250 = vld [vmem:[#allocation5 + $0x68] sm:$0xff]
    %v251 = vld [vmem:[#allocation5 + $0x70] sm:$0xff]
    %v252 = vld [vmem:[#allocation5 + $0x78] sm:$0xff]
    %v253 = vld [vmem:[%s6] sm:$0x1]
    %v255 = vlaneseq
    %v256 = vshrl.u32 %v255, 7
    %v257 = vsub.s32 0, %v256
    %v258 = vrot.slane %v253, %v257
    %260 = vmatprep.subr.mxu0 0.0
    %261 = vmatpush1.msra.mxu0 %v237
    %262 = vmatprep.subr.mxu0 0.0
    %263 = vmatpush1.msra.mxu0 %v238
    %264 = vmatprep.subr.mxu0 0.0
    %265 = vmatpush1.msra.mxu0 %v239
    %266 = vmatprep.subr.mxu0 0.0
    %267 = vmatpush1.msra.mxu0 %v240
    %268 = vmatprep.subr.mxu0 0.0
    %269 = vmatpush1.msra.mxu0 %v241
    %270 = vmatprep.subr.mxu0 0.0
    %271 = vmatpush1.msra.mxu0 %v242
    %272 = vmatprep.subr.mxu0 0.0
    %273 = vmatpush1.msra.mxu0 %v243
    %274 = vmatprep.subr.mxu0 0.0
    %275 = vmatpush1.msra.mxu0 %v244
    %276 = vmatprep.subr.mxu0 0.0
    %277 = vmatpush1.msra.mxu0 %v245
    %278 = vmatprep.subr.mxu0 0.0
    %279 = vmatpush1.msra.mxu0 %v246
    %280 = vmatprep.subr.mxu0 0.0
    %281 = vmatpush1.msra.mxu0 %v247
    %282 = vmatprep.subr.mxu0 0.0
    %283 = vmatpush1.msra.mxu0 %v248
    %284 = vmatprep.subr.mxu0 0.0
    %285 = vmatpush1.msra.mxu0 %v249
    %286 = vmatprep.subr.mxu0 0.0
    %287 = vmatpush1.msra.mxu0 %v250
    %288 = vmatprep.subr.mxu0 0.0
    %289 = vmatpush1.msra.mxu0 %v251
    %290 = vmatprep.subr.mxu0 0.0
    %291 = vmatpush1.msra.mxu0 %v252
    %292 = vmatprep.subr.mxu0 0.0
    %293 = vmatpush1.msra.mxu0 0.0
    %294 = vmatprep.subr.mxu0 0.0
    %295 = vmatpush1.msra.mxu0 0.0
    %296 = vmatprep.subr.mxu0 0.0
    %297 = vmatpush1.msra.mxu0 0.0
    %298 = vmatprep.subr.mxu0 0.0
    %299 = vmatpush1.msra.mxu0 0.0
    %300 = vmatprep.subr.mxu0 0.0
    %301 = vmatpush1.msra.mxu0 0.0
    %302 = vmatprep.subr.mxu0 0.0
    %303 = vmatpush1.msra.mxu0 0.0
    %304 = vmatprep.subr.mxu0 0.0
    %305 = vmatpush1.msra.mxu0 0.0
    %306 = vmatprep.subr.mxu0 0.0
    %307 = vmatpush1.msra.mxu0 0.0
    %308 = vmatprep.subr.mxu0 0.0
    %309 = vmatpush1.msra.mxu0 0.0
    %310 = vmatprep.subr.mxu0 0.0
    %311 = vmatpush1.msra.mxu0 0.0
    %312 = vmatprep.subr.mxu0 0.0
    %313 = vmatpush1.msra.mxu0 0.0
    %314 = vmatprep.subr.mxu0 0.0
    %315 = vmatpush1.msra.mxu0 0.0
    %316 = vmatprep.subr.mxu0 0.0
    %317 = vmatpush1.msra.mxu0 0.0
    %318 = vmatprep.subr.mxu0 0.0
    %319 = vmatpush1.msra.mxu0 0.0
    %320 = vmatprep.subr.mxu0 0.0
    %321 = vmatpush1.msra.mxu0 0.0
    %322 = vmatprep.subr.mxu0 0.0
    %323 = vmatpush1.msra.mxu0 0.0
    %324 = vmatprep.mubr.f32.mxu0 0.0
    %325 = vmatmul.mubr.f32.gmra.mrb[0].mxu0 %v235
    %v326 = vpop.f32.mrb[0].mxu0
    %v327 = vadd.f32 %v258, %v326
    %v328 = vpop.f32.mrb[0].mxu0
    %329 = vmatprep.mubr.f32.mxu0 0.0
    %330 = vmatmul.mubr.f32.gmra.mrb[0].mxu0 %v236
    %v331 = vpop.f32.mrb[0].mxu0
    %v332 = vadd.f32 %v258, %v331
    %v333 = vpop.f32.mrb[0].mxu0
    %334 = vdwg.mxu0
    %335 = vst [vmem:[#allocation7] sm:$0xff] %v327
    %336 = vst [vmem:[#allocation7 + $0x8] sm:$0xff] %v332
    // Predicated region
    $region38: #{tpu_custom_call.1} parent=1 // pred_check
      _
    $region39: #{tpu_custom_call.1} parent=1 // pred_check_branch
      %338 = sbr.rel (0) target = $region41
    $region40: #{tpu_custom_call.1} parent=1 // pred_region
      %s340 = ssub.s32 256, 256
      %341 = vsyncadd [#allocation4], %s340
      %s342 = sshll.u32 [#allocation7], 4
      %s343 = int_to_ptr.vmem [resolvable:$true] %s342
      %348 = dma.vmem_to_hbm [thread:$0]  %s343, 256, %s7, [#allocation4], 128, 128, 8
    $region41: #{tpu_custom_call.1} parent=1 // pred_fallthru
      _
    // Predicated region
    $region42: #{tpu_custom_call.1} parent=1 // pred_check
      _
    $region43: #{tpu_custom_call.1} parent=1 // pred_check_branch
      %350 = sbr.rel (0) target = $region45
    $region44: #{tpu_custom_call.1} parent=1 // pred_region
      %351 = dma.done [#allocation4], 256
    $region45: #{tpu_custom_call.1} parent=1 // pred_fallthru
      _
    %352 = vsyncpa [#allocation3], 1
    %353 = vsyncpa [#allocation6], 1
    %354 = vsyncpa [#allocation4], 1

</llo_original>
